<compile_context>
chip_gen: v5e
topology: v5e:2x2
jax: 0.10.0
libtpu: 0.0.40
codegen_flags: <defaults>
</compile_context>

<pallas_src>
import functools

import jax
import jax.numpy as jnp
from jax.experimental import pallas as pl
from jax.experimental.pallas import tpu as pltpu


def _masked_nse_kernel(yhat_ref, y_ref, q_ref, sum_out_ref, cnt_out_ref,
                       acc_sum, acc_cnt, *, eps, t_total, time_tile, mask_cols):
    j = pl.program_id(1)  # time (reduction) axis, innermost

    @pl.when(j == 0)
    def _init():
        acc_sum[...] = jnp.zeros_like(acc_sum)
        acc_cnt[...] = jnp.zeros_like(acc_cnt)

    # Cast right after load; inputs may be bf16 to halve HBM bytes.
    yhat = yhat_ref[...].astype(jnp.float32)      # (bt, tt)
    y = y_ref[...].astype(jnp.float32)            # (bt, tt), may contain NaN

    mask = jnp.logical_not(jnp.isnan(y))          # (bt, tt) bool
    if mask_cols:
        # Ragged time edge (no HBM pad copy): statically gated, sublane-broadcast.
        col = jax.lax.broadcasted_iota(jnp.int32, (1, time_tile), 1)
        mask = jnp.logical_and(mask, col < (t_total - j * time_tile))

    diff = yhat - y                               # NaN where y is NaN; masked below
    # NaN/garbage in the untaken select branch does not propagate.
    sq = jnp.where(mask, diff * diff, 0.0)

    # Per-row partials only: tiny (bt, 1) accumulators, no full-block scratch RMW.
    acc_sum[...] += jnp.sum(sq, axis=1, keepdims=True)
    cnt_rows = jnp.sum(mask.astype(jnp.float32), axis=1, keepdims=True)  # exact (<= tt)
    acc_cnt[...] += cnt_rows.astype(jnp.int32)

    @pl.when(j == pl.num_programs(1) - 1)
    def _finalize():
        # Weighting applied once per batch tile (deferred NSE weighting).
        q = q_ref[...].astype(jnp.float32)        # (bt, 1)
        weights = 1.0 / (q + eps) ** 2            # (bt, 1)
        s_rows = weights * acc_sum[...]           # (bt, 1)
        bt = s_rows.shape[0]
        # Lane-dense output blocks (unmasked vst); per-row values replicated.
        sum_out_ref[...] = jnp.broadcast_to(s_rows, (bt, 128))
        cnt_out_ref[...] = jnp.broadcast_to(acc_cnt[...], (bt, 128))


def _round_up(x, m):
    return ((x + m - 1) // m) * m


def _cdiv(a, b):
    return (a + b - 1) // b


def masked_nse_loss(y_hat, y, q_stds, *, eps=0.1,
                    max_batch_tile=256, max_time_tile=8192):
    B, T = y_hat.shape
    assert y.shape == (B, T) and q_stds.shape == (B,)

    itemsize = jnp.dtype(y_hat.dtype).itemsize + jnp.dtype(y.dtype).itemsize
    # bf16 inputs: align the batch tile to 16 (sublane packing); f32: 8.
    align_b = 16 if (jnp.dtype(y_hat.dtype).itemsize < 4
                     or jnp.dtype(y.dtype).itemsize < 4) else 8

    # Batch tile: guarantee >= 2 tiles whenever B allows so the "parallel" axis
    # can split across both v7x TensorCores. Never exceed B (no HBM padding).
    half = _round_up(max(1, _cdiv(B, 2)), align_b)
    bt = min(max_batch_tile, half)
    if bt > B:
        bt = B                       # block dim == full dim (allowed)
    nb = _cdiv(B, bt)

    # Time tile: largest 128-multiple <= T (or full T when T < 128).
    if T >= 128:
        tt = min(max_time_tile, (T // 128) * 128)
    else:
        tt = T                       # block dim == full dim (allowed)
    nt = _cdiv(T, tt)
    mask_cols = (T % tt) != 0        # statically gated ragged-edge masking

    q2d = q_stds.reshape(B, 1)

    kernel = functools.partial(_masked_nse_kernel, eps=float(eps), t_total=T,
                               time_tile=tt, mask_cols=bool(mask_cols))

    # Input blocks are double-buffered by Pallas: budget 2x block pair + headroom.
    in_bytes = bt * tt * itemsize
    vmem_limit = int(min(100 * 2**20, max(32 * 2**20, 2 * in_bytes + 8 * 2**20)))

    sum_rows, cnt_rows = pl.pallas_call(
        kernel,
        out_shape=(
            jax.ShapeDtypeStruct((nb * bt, 128), jnp.float32),  # per-row weighted sums
            jax.ShapeDtypeStruct((nb * bt, 128), jnp.int32),    # per-row valid counts
        ),
        grid_spec=pltpu.PrefetchScalarGridSpec(
            num_scalar_prefetch=0,
            grid=(nb, nt),
            in_specs=[
                pl.BlockSpec((bt, tt), lambda i, j: (i, j)),    # y_hat
                pl.BlockSpec((bt, tt), lambda i, j: (i, j)),    # y
                pl.BlockSpec((bt, 1), lambda i, j: (i, 0)),     # q_stds
            ],
            out_specs=[
                pl.BlockSpec((bt, 128), lambda i, j: (i, 0)),
                pl.BlockSpec((bt, 128), lambda i, j: (i, 0)),
            ],
            scratch_shapes=[
                pltpu.VMEM((bt, 1), jnp.float32),   # per-row weighted-SE partial
                pltpu.VMEM((bt, 1), jnp.int32),     # per-row valid count (exact)
            ],
        ),
        compiler_params=pltpu.CompilerParams(
            dimension_semantics=("parallel", "arbitrary"),
            vmem_limit_bytes=vmem_limit,
        ),
    )(y_hat, y, q2d)

    # Rows >= B (ragged last batch tile) are garbage by construction; drop them
    # here instead of masking in-kernel. Tiny final reduce + divide in plain XLA.
    total_sum = jnp.sum(sum_rows[:B, 0])
    total_cnt = jnp.sum(cnt_rows[:B, 0])
    return total_sum / total_cnt.astype(jnp.float32)


def _reference(y_hat, y, q_stds, eps=0.1):
    q = jnp.broadcast_to(q_stds[:, None], y_hat.shape)
    mask = jnp.logical_not(jnp.isnan(y))
    se = (y_hat - jnp.where(mask, y, 0.0)) ** 2
    w = 1.0 / (q + eps) ** 2
    scaled = jnp.where(mask, w * se, 0.0)
    return jnp.sum(scaled) / jnp.sum(mask.astype(jnp.float32))


if __name__ == "__main__":
    key = jax.random.PRNGKey(0)
    k1, k2, k3, k4 = jax.random.split(key, 4)

    # Test 1: deliberately NOT multiples of 8 / 128 — exercises partial blocks in
    # both dims, in-kernel ragged-column masking, nb=2, nt=2, wrapper row slice.
    B, T = 10, 300
    y_hat = jax.random.normal(k1, (B, T), dtype=jnp.float32)
    y_clean = jax.random.normal(k2, (B, T), dtype=jnp.float32)
    nan_mask = jax.random.bernoulli(k3, p=0.2, shape=(B, T))
    y = jnp.where(nan_mask, jnp.nan, y_clean)
    q_stds = jax.random.uniform(k4, (B,), minval=0.5, maxval=2.0, dtype=jnp.float32)

    loss = masked_nse_loss(y_hat, y, q_stds, eps=0.1)
    jax.block_until_ready(loss)
    ref = _reference(y_hat, y, q_stds, eps=0.1)
    assert jnp.allclose(loss, ref, rtol=1e-5, atol=1e-6), (loss, ref)

    # Test 2: bf16 inputs, tile-aligned shapes (no edge masking path).
    B2, T2 = 16, 512
    k5, k6, k7, k8 = jax.random.split(jax.random.PRNGKey(1), 4)
    y_hat2_f32 = jax.random.normal(k5, (B2, T2), dtype=jnp.float32)
    y2_f32 = jnp.where(jax.random.bernoulli(k7, p=0.25, shape=(B2, T2)),
                       jnp.nan, jax.random.normal(k6, (B2, T2), dtype=jnp.float32))
    q2 = jax.random.uniform(k8, (B2,), minval=0.5, maxval=2.0, dtype=jnp.float32)
    y_hat2 = y_hat2_f32.astype(jnp.bfloat16)
    y2 = y2_f32.astype(jnp.bfloat16)

    loss2 = masked_nse_loss(y_hat2, y2, q2, eps=0.1)
    jax.block_until_ready(loss2)
    ref2 = _reference(y_hat2.astype(jnp.float32), y2.astype(jnp.float32), q2, eps=0.1)
    assert jnp.allclose(loss2, ref2, rtol=1e-5, atol=1e-6), (loss2, ref2)

    print("KERNEL_OK")
</pallas_src>

<mosaic_0001>
module attributes {stable_mosaic.version = 11 : i64} {
  func.func @_masked_nse_kernel(%arg0: i32, %arg1: i32, %arg2: memref<8x256xf32, #tpu.memory_space<vmem>>, %arg3: memref<8x256xf32, #tpu.memory_space<vmem>>, %arg4: memref<8x1xf32, #tpu.memory_space<vmem>>, %arg5: memref<8x128xf32, #tpu.memory_space<vmem>>, %arg6: memref<8x128xi32, #tpu.memory_space<vmem>>, %arg7: memref<8x1xf32, #tpu.memory_space<vmem>>, %arg8: memref<8x1xi32, #tpu.memory_space<vmem>>) attributes {dimension_semantics = [#tpu.dimension_semantics<parallel>, #tpu.dimension_semantics<arbitrary>], iteration_bounds = array<i64: 2, 2>, scalar_prefetch = 0 : i64, scratch_operands = 2 : i64, tpu.core_type = #tpu.core_type<tc>, window_params = [{transform_indices = @transform_0, window_bounds = array<i64: 8, 256>}, {transform_indices = @transform_1, window_bounds = array<i64: 8, 256>}, {transform_indices = @transform_2, window_bounds = array<i64: 8, 1>}, {transform_indices = @transform_3, window_bounds = array<i64: 8, 128>}, {transform_indices = @transform_4, window_bounds = array<i64: 8, 128>}]} {
    %c0_i32 = arith.constant 0 : i32
    %0 = arith.cmpi eq, %arg1, %c0_i32 : i32
    %1 = arith.extui %0 : i1 to i32
    %c0_i32_0 = arith.constant 0 : i32
    %2 = arith.cmpi ne, %1, %c0_i32_0 : i32
    scf.if %2 {
      %cst_16 = arith.constant 0.000000e+00 : f32
      %34 = vector.broadcast %cst_16 : f32 to vector<8x1xf32>
      %c0_17 = arith.constant 0 : index
      %c0_18 = arith.constant 0 : index
      %35 = vector.load %arg7[%c0_17, %c0_18] : memref<8x1xf32, #tpu.memory_space<vmem>>, vector<8x1xf32>
      tpu.vector_store %arg7[%c0_17, %c0_18], %34 {strides = array<i32>} : memref<8x1xf32, #tpu.memory_space<vmem>>, vector<8x1xf32>,
      %c0_i32_19 = arith.constant 0 : i32
      %36 = vector.broadcast %c0_i32_19 : i32 to vector<8x1xi32>
      %c0_20 = arith.constant 0 : index
      %c0_21 = arith.constant 0 : index
      %37 = vector.load %arg8[%c0_20, %c0_21] : memref<8x1xi32, #tpu.memory_space<vmem>>, vector<8x1xi32>
      tpu.vector_store %arg8[%c0_20, %c0_21], %36 {strides = array<i32>} : memref<8x1xi32, #tpu.memory_space<vmem>>, vector<8x1xi32>,
    } else {
    }
    %c0 = arith.constant 0 : index
    %c0_1 = arith.constant 0 : index
    %3 = vector.load %arg2[%c0, %c0_1] : memref<8x256xf32, #tpu.memory_space<vmem>>, vector<8x256xf32>
    %c0_2 = arith.constant 0 : index
    %c0_3 = arith.constant 0 : index
    %4 = vector.load %arg3[%c0_2, %c0_3] : memref<8x256xf32, #tpu.memory_space<vmem>>, vector<8x256xf32>
    %5 = arith.cmpf one, %4, %4 : vector<8x256xf32>
    %cst = arith.constant dense<true> : vector<8x256xi1>
    %6 = arith.xori %5, %cst : vector<8x256xi1>
    %7 = tpu.iota {dimensions = array<i32: 1>} : vector<1x256xi32>
    %c256_i32 = arith.constant 256 : i32
    %8 = arith.muli %arg1, %c256_i32 : i32
    %c300_i32 = arith.constant 300 : i32
    %9 = arith.subi %c300_i32, %8 : i32
    %10 = vector.broadcast %9 : i32 to vector<1x256xi32>
    %11 = arith.cmpi slt, %7, %10 : vector<1x256xi32>
    %12 = vector.broadcast %11 : vector<1x256xi1> to vector<8x256xi1>
    %13 = arith.andi %6, %12 : vector<8x256xi1>
    %14 = arith.subf %3, %4 : vector<8x256xf32>
    %15 = arith.mulf %14, %14 : vector<8x256xf32>
    %cst_4 = arith.constant 0.000000e+00 : f32
    %16 = vector.broadcast %cst_4 : f32 to vector<8x256xf32>
    %17 = arith.select %13, %15, %16 : vector<8x256xi1>, vector<8x256xf32>
    %c0_5 = arith.constant 0 : index
    %c0_6 = arith.constant 0 : index
    %18 = vector.load %arg7[%c0_5, %c0_6] : memref<8x1xf32, #tpu.memory_space<vmem>>, vector<8x1xf32>
    %cst_7 = arith.constant dense<0.000000e+00> : vector<8xf32>
    %19 = vector.multi_reduction <add>, %17, %cst_7 [1] : vector<8x256xf32> to vector<8xf32>
    %20 = vector.shape_cast %19 : vector<8xf32> to vector<8x1xf32>
    %21 = arith.addf %18, %20 : vector<8x1xf32>
    %c0_8 = arith.constant 0 : index
    %c0_9 = arith.constant 0 : index
    %22 = vector.load %arg7[%c0_8, %c0_9] : memref<8x1xf32, #tpu.memory_space<vmem>>, vector<8x1xf32>
    tpu.vector_store %arg7[%c0_8, %c0_9], %21 {strides = array<i32>} : memref<8x1xf32, #tpu.memory_space<vmem>>, vector<8x1xf32>,
    %23 = arith.extui %13 : vector<8x256xi1> to vector<8x256xi32>
    %24 = arith.sitofp %23 : vector<8x256xi32> to vector<8x256xf32>
    %cst_10 = arith.constant dense<0.000000e+00> : vector<8xf32>
    %25 = vector.multi_reduction <add>, %24, %cst_10 [1] : vector<8x256xf32> to vector<8xf32>
    %26 = vector.shape_cast %25 : vector<8xf32> to vector<8x1xf32>
    %c0_11 = arith.constant 0 : index
    %c0_12 = arith.constant 0 : index
    %27 = vector.load %arg8[%c0_11, %c0_12] : memref<8x1xi32, #tpu.memory_space<vmem>>, vector<8x1xi32>
    %28 = arith.fptosi %26 : vector<8x1xf32> to vector<8x1xi32>
    %29 = arith.addi %27, %28 : vector<8x1xi32>
    %c0_13 = arith.constant 0 : index
    %c0_14 = arith.constant 0 : index
    %30 = vector.load %arg8[%c0_13, %c0_14] : memref<8x1xi32, #tpu.memory_space<vmem>>, vector<8x1xi32>
    tpu.vector_store %arg8[%c0_13, %c0_14], %29 {strides = array<i32>} : memref<8x1xi32, #tpu.memory_space<vmem>>, vector<8x1xi32>,
    %c1_i32 = arith.constant 1 : i32
    %31 = arith.cmpi eq, %arg1, %c1_i32 : i32
    %32 = arith.extui %31 : i1 to i32
    %c0_i32_15 = arith.constant 0 : i32
    %33 = arith.cmpi ne, %32, %c0_i32_15 : i32
    scf.if %33 {
      %c0_16 = arith.constant 0 : index
      %c0_17 = arith.constant 0 : index
      %34 = vector.load %arg4[%c0_16, %c0_17] : memref<8x1xf32, #tpu.memory_space<vmem>>, vector<8x1xf32>
      %cst_18 = arith.constant 1.000000e-01 : f32
      %35 = vector.broadcast %cst_18 : f32 to vector<8x1xf32>
      %36 = arith.addf %34, %35 : vector<8x1xf32>
      %37 = arith.mulf %36, %36 : vector<8x1xf32>
      %cst_19 = arith.constant 1.000000e+00 : f32
      %38 = vector.broadcast %cst_19 : f32 to vector<8x1xf32>
      %39 = arith.divf %38, %37 : vector<8x1xf32>
      %c0_20 = arith.constant 0 : index
      %c0_21 = arith.constant 0 : index
      %40 = vector.load %arg7[%c0_20, %c0_21] : memref<8x1xf32, #tpu.memory_space<vmem>>, vector<8x1xf32>
      %41 = arith.mulf %39, %40 : vector<8x1xf32>
      %42 = vector.shape_cast %41 : vector<8x1xf32> to vector<8x1xf32>
      %43 = vector.broadcast %42 : vector<8x1xf32> to vector<8x128xf32>
      %c0_22 = arith.constant 0 : index
      %c0_23 = arith.constant 0 : index
      %44 = vector.load %arg5[%c0_22, %c0_23] : memref<8x128xf32, #tpu.memory_space<vmem>>, vector<8x128xf32>
      tpu.vector_store %arg5[%c0_22, %c0_23], %43 {strides = array<i32>} : memref<8x128xf32, #tpu.memory_space<vmem>>, vector<8x128xf32>,
      %c0_24 = arith.constant 0 : index
      %c0_25 = arith.constant 0 : index
      %45 = vector.load %arg8[%c0_24, %c0_25] : memref<8x1xi32, #tpu.memory_space<vmem>>, vector<8x1xi32>
      %46 = vector.shape_cast %45 : vector<8x1xi32> to vector<8x1xi32>
      %47 = vector.broadcast %46 : vector<8x1xi32> to vector<8x128xi32>
      %c0_26 = arith.constant 0 : index
      %c0_27 = arith.constant 0 : index
      %48 = vector.load %arg6[%c0_26, %c0_27] : memref<8x128xi32, #tpu.memory_space<vmem>>, vector<8x128xi32>
      tpu.vector_store %arg6[%c0_26, %c0_27], %47 {strides = array<i32>} : memref<8x128xi32, #tpu.memory_space<vmem>>, vector<8x128xi32>,
    } else {
    }
    return
  }
  func.func @transform_0(%arg0: i32, %arg1: i32) -> (i32, i32) {
    %c0_i32 = arith.constant 0 : i32
    return %arg0, %arg1 : i32, i32
  }
  func.func @transform_1(%arg0: i32, %arg1: i32) -> (i32, i32) {
    %c0_i32 = arith.constant 0 : i32
    return %arg0, %arg1 : i32, i32
  }
  func.func @transform_2(%arg0: i32, %arg1: i32) -> (i32, i32) {
    %c0_i32 = arith.constant 0 : i32
    %c0_i32_0 = arith.constant 0 : i32
    return %arg0, %c0_i32 : i32, i32
  }
  func.func @transform_3(%arg0: i32, %arg1: i32) -> (i32, i32) {
    %c0_i32 = arith.constant 0 : i32
    %c0_i32_0 = arith.constant 0 : i32
    return %arg0, %c0_i32 : i32, i32
  }
  func.func @transform_4(%arg0: i32, %arg1: i32) -> (i32, i32) {
    %c0_i32 = arith.constant 0 : i32
    %c0_i32_0 = arith.constant 0 : i32
    return %arg0, %c0_i32 : i32, i32
  }
}

</mosaic_0001>

<llo_original>
// kernel: tpu_custom_call.1
$region0: #{tpu_custom_call.1}
  #allocation0 [shape = 'u32[]', space=smem, size = 0x4, offset = 0x4, fixed_abs, tag = 'smem constant byte address 0x4 - core index']
  #allocation1 [shape = 'u32[72,128]{1,0:T(1,128)}', space=vmem, size = 0x9000, scoped, tag = 'internal scratch']
  #allocation2 [shape = 'f32[8,1]{1,0:T(8,128)}', space=vmem, size = 0x1000, scoped, tag = 'scratch operand']
  #allocation3 [shape = 's32[8,1]{1,0:T(8,128)}', space=vmem, size = 0x1000, scoped, tag = 'scratch operand']
  %s0 = inlined_call_operand.hbm [shape: f32[10,300], index: 0, kind: input, shape index: {}]
  %s1 = inlined_call_operand.hbm [shape: f32[10,300], index: 1, kind: input, shape index: {}]
  %s2 = inlined_call_operand.vmem [shape: f32[10,1], index: 2, kind: input, shape index: {}]
  %s3 = inlined_call_operand.hbm [shape: f32[16,128], index: 3, kind: output, shape index: {0}]
  %s4 = inlined_call_operand.hbm [shape: s32[16,128], index: 4, kind: output, shape index: {1}]
  %5 = xla_tuple %s3, %s4
  %s6 = sld [smem:[#allocation0]]
  $region69: #{tpu_custom_call.1} parent=0
    _
  %s8 = ssub.s32 1, %s6
  %s9 = scalar_select 0, %s8, %s6
  $region1: #{tpu_custom_call.1} parent=0
    #allocation4 [shape = 'u8[16384]{0}', space=vmem, size = 0x4000, scoped, tag = 'input window, operand 0']
    #allocation5 [shape = 's32[2]{0}', space=sflag, size = 0x8, scoped, tag = 'scoped memory for tpu_custom_call.1']
    #allocation6 [shape = 's32[2]{0}', space=sflag, size = 0x8, scoped, tag = 'scoped memory for tpu_custom_call.1']
    #allocation7 [shape = 'u8[16384]{0}', space=vmem, size = 0x4000, scoped, tag = 'input window, operand 1']
    #allocation8 [shape = 's32[2]{0}', space=sflag, size = 0x8, scoped, tag = 'scoped memory for tpu_custom_call.1']
    #allocation9 [shape = 'u8[8192]{0}', space=vmem, size = 0x2000, scoped, tag = 'output window, operand 0']
    #allocation10 [shape = 'u8[8192]{0}', space=vmem, size = 0x2000, scoped, tag = 'output window, operand 1']
    #allocation11 [shape = 's32[2]{0}', space=sflag, size = 0x8, scoped, tag = 'scoped memory for tpu_custom_call.1']
    %10 = vsyncpa [#allocation5], 0
    %s11 = scalar_lea.sflag [#allocation5], 1
    %12 = vsyncpa %s11, 0
    %13 = vsyncpa [#allocation8], 0
    %s14 = scalar_lea.sflag [#allocation8], 1
    %15 = vsyncpa %s14, 0
    %16 = vsyncpa [#allocation6], 0
    %s17 = scalar_lea.sflag [#allocation6], 1
    %18 = vsyncpa %s17, 0
    %19 = vsyncpa [#allocation11], 0
    %s20 = scalar_lea.sflag [#allocation11], 1
    %21 = vsyncpa %s20, 0
    loop: start=0, step=1, limit=6
    $region2: #{tpu_custom_call.1} parent=1 // loop_pre_header
      _
    $region3: #{tpu_custom_call.1} parent=1 // loop_header
      %s23 = sphi 0, %s27
      %p24 = scmp.ge.s32.totalorder %s23, 6
      %s30 = sphi 0, %s42
      %s31 = sphi 0, %s38
      %s32 = sphi 0, %s30
      %s33 = sphi 0, %s31
      %s34 = sphi 0, %s32
      %s35 = sphi 0, %s33
      %s47 = sphi 0, %s49
      %s50 = sphi 0, %s47
      %s51 = sphi 0, %s50
      %s67 = sphi 0, %s51
      %s75 = sphi 0, %s77
      %s78 = sphi 0, %s75
      %s79 = sphi 0, %s78
      %s95 = sphi 0, %s79
      %s101 = sphi 0, %s103
      %s104 = sphi 0, %s101
      %s105 = sphi 0, %s104
      %s121 = sphi 0, %s105
      %s127 = sphi 0, %s129
      %s130 = sphi 0, %s127
      %s131 = sphi 0, %s130
      %s147 = sphi 0, %s131
      %s153 = sphi 0, %s155
      %s156 = sphi 0, %s153
      %s157 = sphi 0, %s156
      %s173 = sphi 0, %s157
    $region4: #{tpu_custom_call.1} parent=1 // loop_header_branch
      %26 = sbr.rel (%p24) target = $region8
    $region5: #{tpu_custom_call.1} parent=1 // loop_body
      %s28 = ssub.s32 %s23, 1
      %s29 = ssub.s32 %s23, 2
      %s36 = sadd.s32 1, %s31
      %p37 = scmp.ge.s32.totalorder %s36, 2
      %s38 = scalar_select %p37, 0, %s36
      %s39 = sadd.s32 1, %s30
      %s40 = scalar_select %p37, %s39, %s30
      %p41 = scmp.ge.s32.totalorder %s40, 2
      %s42 = scalar_select %p41, 0, %s40
      %s43 = ssub.s32 %s30, %s42
      %s44 = ssub.s32 %s31, %s38
      %s45 = sor.u32 %s43, %s44
      %p46 = scmp.eq.s32.totalorder %s45, 0
      %s48 = sadd.s32 %s47, 1
      %s49 = scalar_select %p46, %s47, %s48
      %p52 = pneg %p46
      %p53 = scmp.eq.s32.totalorder %s23, 3
      %p54 = por %p52, %p53
      %p55 = scmp.ne.s32.totalorder %s47, %s50
      %p56 = scmp.eq.s32.totalorder %s23, 0
      %p57 = por %p55, %p56
      %p58 = scmp.ne.s32.totalorder %s47, %s50
      %p59 = scmp.eq.s32.totalorder %s28, 3
      %p60 = por %p58, %p59
      %p61 = scmp.ne.s32.totalorder %s50, %s51
      %p62 = scmp.eq.s32.totalorder %s28, 0
      %p63 = por %p61, %p62
      %p64 = scmp.ne.s32.totalorder %s50, %s51
      %p65 = scmp.eq.s32.totalorder %s29, 3
      %p66 = por %p64, %p65
      %p68 = scmp.ne.s32.totalorder %s51, %s67
      %p69 = scmp.eq.s32.totalorder %s29, 0
      %p70 = por %p68, %p69
      %s71 = ssub.s32 %s30, %s42
      %s72 = ssub.s32 %s31, %s38
      %s73 = sor.u32 %s71, %s72
      %p74 = scmp.eq.s32.totalorder %s73, 0
      %s76 = sadd.s32 %s75, 1
      %s77 = scalar_select %p74, %s75, %s76
      %p80 = pneg %p74
      %p81 = scmp.eq.s32.totalorder %s23, 3
      %p82 = por %p80, %p81
      %p83 = scmp.ne.s32.totalorder %s75, %s78
      %p84 = scmp.eq.s32.totalorder %s23, 0
      %p85 = por %p83, %p84
      %p86 = scmp.ne.s32.totalorder %s75, %s78
      %p87 = scmp.eq.s32.totalorder %s28, 3
      %p88 = por %p86, %p87
      %p89 = scmp.ne.s32.totalorder %s78, %s79
      %p90 = scmp.eq.s32.totalorder %s28, 0
      %p91 = por %p89, %p90
      %p92 = scmp.ne.s32.totalorder %s78, %s79
      %p93 = scmp.eq.s32.totalorder %s29, 3
      %p94 = por %p92, %p93
      %p96 = scmp.ne.s32.totalorder %s79, %s95
      %p97 = scmp.eq.s32.totalorder %s29, 0
      %p98 = por %p96, %p97
      %s99 = ssub.s32 %s30, %s42
      %p100 = scmp.eq.s32.totalorder %s99, 0
      %s102 = sadd.s32 %s101, 1
      %s103 = scalar_select %p100, %s101, %s102
      %p106 = pneg %p100
      %p107 = scmp.eq.s32.totalorder %s23, 3
      %p108 = por %p106, %p107
      %p109 = scmp.ne.s32.totalorder %s101, %s104
      %p110 = scmp.eq.s32.totalorder %s23, 0
      %p111 = por %p109, %p110
      %p112 = scmp.ne.s32.totalorder %s101, %s104
      %p113 = scmp.eq.s32.totalorder %s28, 3
      %p114 = por %p112, %p113
      %p115 = scmp.ne.s32.totalorder %s104, %s105
      %p116 = scmp.eq.s32.totalorder %s28, 0
      %p117 = por %p115, %p116
      %p118 = scmp.ne.s32.totalorder %s104, %s105
      %p119 = scmp.eq.s32.totalorder %s29, 3
      %p120 = por %p118, %p119
      %p122 = scmp.ne.s32.totalorder %s105, %s121
      %p123 = scmp.eq.s32.totalorder %s29, 0
      %p124 = por %p122, %p123
      %s125 = ssub.s32 %s30, %s42
      %p126 = scmp.eq.s32.totalorder %s125, 0
      %s128 = sadd.s32 %s127, 1
      %s129 = scalar_select %p126, %s127, %s128
      %p132 = pneg %p126
      %p133 = scmp.eq.s32.totalorder %s23, 3
      %p134 = por %p132, %p133
      %p135 = scmp.ne.s32.totalorder %s127, %s130
      %p136 = scmp.eq.s32.totalorder %s23, 0
      %p137 = por %p135, %p136
      %p138 = scmp.ne.s32.totalorder %s127, %s130
      %p139 = scmp.eq.s32.totalorder %s28, 3
      %p140 = por %p138, %p139
      %p141 = scmp.ne.s32.totalorder %s130, %s131
      %p142 = scmp.eq.s32.totalorder %s28, 0
      %p143 = por %p141, %p142
      %p144 = scmp.ne.s32.totalorder %s130, %s131
      %p145 = scmp.eq.s32.totalorder %s29, 3
      %p146 = por %p144, %p145
      %p148 = scmp.ne.s32.totalorder %s131, %s147
      %p149 = scmp.eq.s32.totalorder %s29, 0
      %p150 = por %p148, %p149
      %s151 = ssub.s32 %s30, %s42
      %p152 = scmp.eq.s32.totalorder %s151, 0
      %s154 = sadd.s32 %s153, 1
      %s155 = scalar_select %p152, %s153, %s154
      %p158 = pneg %p152
      %p159 = scmp.eq.s32.totalorder %s23, 3
      %p160 = por %p158, %p159
      %p161 = scmp.ne.s32.totalorder %s153, %s156
      %p162 = scmp.eq.s32.totalorder %s23, 0
      %p163 = por %p161, %p162
      %p164 = scmp.ne.s32.totalorder %s153, %s156
      %p165 = scmp.eq.s32.totalorder %s28, 3
      %p166 = por %p164, %p165
      %p167 = scmp.ne.s32.totalorder %s156, %s157
      %p168 = scmp.eq.s32.totalorder %s28, 0
      %p169 = por %p167, %p168
      %p170 = scmp.ne.s32.totalorder %s156, %s157
      %p171 = scmp.eq.s32.totalorder %s29, 3
      %p172 = por %p170, %p171
      %p174 = scmp.ne.s32.totalorder %s157, %s173
      %p175 = scmp.eq.s32.totalorder %s29, 0
      %p176 = por %p174, %p175
      %p177 = scmp.le.s32.totalorder 1, %s23
      %p178 = scmp.lt.s32.totalorder %s23, 5
      %p179 = pnand %p177, %p178
      %p180 = pneg %p179
      // Predicated region
      $region9: #{tpu_custom_call.1} parent=5 // pred_check
        _
      $region10: #{tpu_custom_call.1} parent=5 // pred_check_branch
        %182 = sbr.rel (%p179) target = $region12
      $region11: #{tpu_custom_call.1} parent=5 // pred_region
        %s183 = ssub.s32 %s23, 1
      $region12: #{tpu_custom_call.1} parent=5 // pred_fallthru
        _
      %p184 = scmp.lt.s32.totalorder %s23, 4
      // Predicated region
      $region13: #{tpu_custom_call.1} parent=5 // pred_check
        %p185 = pneg %p184
      $region14: #{tpu_custom_call.1} parent=5 // pred_check_branch
        %187 = sbr.rel (%p185) target = $region16
      $region15: #{tpu_custom_call.1} parent=5 // pred_region
        // Predicated region
        $region17: #{tpu_custom_call.1} parent=15 // pred_check
          %p188 = pneg %p57
        $region18: #{tpu_custom_call.1} parent=15 // pred_check_branch
          %190 = sbr.rel (%p188) target = $region20
        $region19: #{tpu_custom_call.1} parent=15 // pred_region
          %s191 = sand.u32 %s47, 1
          %s192 = scalar_lea.sflag [#allocation5], %s191
          %s193 = sand.u32 %s47, 1
          %s194 = smul.addr %s193, 16
          %s195 = scalar_lea.vmem [#allocation4], %s194
          %s196 = smul.u32 2, %s31
          %s197 = ssub.s32 3, %s196
          %p198 = scmp.lt.s32.totalorder %s197, 2
          %s199 = scalar_select %p198, %s197, 2
          %s200 = smul.u32 8, %s199
          %s201 = ssub.s32 16, %s200
          %s202 = sshll.u32 %s201, 4
          %203 = vsyncadd %s192, %s202
          %p204 = scmp.ne.s32.totalorder 0, %s200
          %s205 = smul.addr %s30, 3
          %s206 = sadd.s32 %s196, %s205
          %s207 = smul.addr %s206, 8
          %s208 = scalar_lea.hbm %s0, %s207
          %s209 = smul.u32 %s199, 8
          %s210 = sshll.u32 %s209, 4
          %s211 = sshll.u32 %s208, 4
          %s212 = int_to_ptr.hbm [resolvable:$true] %s211
          %s213 = sshll.u32 %s195, 4
          %s214 = int_to_ptr.vmem [resolvable:$true] %s213
          %216 = dma.hbm_to_vmem [thread:$0]  (%p204), %s212, %s210, %s214, %s192
        $region20: #{tpu_custom_call.1} parent=15 // pred_fallthru
          _
        // Predicated region
        $region21: #{tpu_custom_call.1} parent=15 // pred_check
          %p217 = pneg %p85
        $region22: #{tpu_custom_call.1} parent=15 // pred_check_branch
          %219 = sbr.rel (%p217) target = $region24
        $region23: #{tpu_custom_call.1} parent=15 // pred_region
          %s220 = sand.u32 %s75, 1
          %s221 = scalar_lea.sflag [#allocation8], %s220
          %s222 = sand.u32 %s75, 1
          %s223 = smul.addr %s222, 16
          %s224 = scalar_lea.vmem [#allocation7], %s223
          %s225 = smul.u32 2, %s31
          %s226 = ssub.s32 3, %s225
          %p227 = scmp.lt.s32.totalorder %s226, 2
          %s228 = scalar_select %p227, %s226, 2
          %s229 = smul.u32 8, %s228
          %s230 = ssub.s32 16, %s229
          %s231 = sshll.u32 %s230, 4
          %232 = vsyncadd %s221, %s231
          %p233 = scmp.ne.s32.totalorder 0, %s229
          %s234 = smul.addr %s30, 3
          %s235 = sadd.s32 %s225, %s234
          %s236 = smul.addr %s235, 8
          %s237 = scalar_lea.hbm %s1, %s236
          %s238 = smul.u32 %s228, 8
          %s239 = sshll.u32 %s238, 4
          %s240 = sshll.u32 %s237, 4
          %s241 = int_to_ptr.hbm [resolvable:$true] %s240
          %s242 = sshll.u32 %s224, 4
          %s243 = int_to_ptr.vmem [resolvable:$true] %s242
          %245 = dma.hbm_to_vmem [thread:$0]  (%p233), %s241, %s239, %s243, %s221
        $region24: #{tpu_custom_call.1} parent=15 // pred_fallthru
          _
        // Predicated region
        $region25: #{tpu_custom_call.1} parent=15 // pred_check
          %p246 = pneg %p111
        $region26: #{tpu_custom_call.1} parent=15 // pred_check_branch
          %248 = sbr.rel (%p246) target = $region28
        $region27: #{tpu_custom_call.1} parent=15 // pred_region
          %p249 = scmp.lt.s32.totalorder %s30, 1
          %s250 = scalar_select %p249, %s30, 1
          %s251 = smul.addr %s250, 8
          %s252 = scalar_lea.vmem %s2, %s251
        $region28: #{tpu_custom_call.1} parent=15 // pred_fallthru
          _
      $region16: #{tpu_custom_call.1} parent=5 // pred_fallthru
        _
      %p253 = scmp.le.s32.totalorder 1, %s23
      %p254 = scmp.lt.s32.totalorder %s23, 5
      %p255 = pnand %p253, %p254
      %p256 = pneg %p255
      // Predicated region
      $region29: #{tpu_custom_call.1} parent=5 // pred_check
        _
      $region30: #{tpu_custom_call.1} parent=5 // pred_check_branch
        %258 = sbr.rel (%p255) target = $region32
      $region31: #{tpu_custom_call.1} parent=5 // pred_region
        %s259 = ssub.s32 %s23, 1
        %s260 = sand.u32 %s50, 1
        %s261 = scalar_lea.sflag [#allocation5], %s260
        %s262 = sand.u32 %s50, 1
        %s263 = smul.addr %s262, 16
        %s264 = scalar_lea.vmem [#allocation4], %s263
        // Predicated region
        $region33: #{tpu_custom_call.1} parent=31 // pred_check
          %p265 = pneg %p63
        $region34: #{tpu_custom_call.1} parent=31 // pred_check_branch
          %267 = sbr.rel (%p265) target = $region36
        $region35: #{tpu_custom_call.1} parent=31 // pred_region
          %269 = dma.done %s261, 256
        $region36: #{tpu_custom_call.1} parent=31 // pred_fallthru
          _
        %s270 = sand.u32 %s78, 1
        %s271 = scalar_lea.sflag [#allocation8], %s270
        %s272 = sand.u32 %s78, 1
        %s273 = smul.addr %s272, 16
        %s274 = scalar_lea.vmem [#allocation7], %s273
        // Predicated region
        $region37: #{tpu_custom_call.1} parent=31 // pred_check
          %p275 = pneg %p91
        $region38: #{tpu_custom_call.1} parent=31 // pred_check_branch
          %277 = sbr.rel (%p275) target = $region40
        $region39: #{tpu_custom_call.1} parent=31 // pred_region
          %279 = dma.done %s271, 256
        $region40: #{tpu_custom_call.1} parent=31 // pred_fallthru
          _
        %s280 = sand.u32 %s50, 1
        %s281 = scalar_lea.sflag [#allocation5], %s280
        %s282 = sand.u32 %s50, 1
        %s283 = smul.addr %s282, 16
        %s284 = scalar_lea.vmem [#allocation4], %s283
        %p285 = pneg %p63
        %p286 = pneg %p60
        %s287 = sand.u32 %s78, 1
        %s288 = scalar_lea.sflag [#allocation8], %s287
        %s289 = sand.u32 %s78, 1
        %s290 = smul.addr %s289, 16
        %s291 = scalar_lea.vmem [#allocation7], %s290
        %p292 = pneg %p91
        %p293 = pneg %p88
        %p294 = scmp.lt.s32.totalorder %s32, 1
        %s295 = scalar_select %p294, %s32, 1
        %s296 = smul.addr %s295, 8
        %s297 = scalar_lea.vmem %s2, %s296
        %p298 = pneg %p117
        %p299 = pneg %p114
        %p300 = pneg %p143
        %p301 = pneg %p140
        %s302 = sand.u32 %s130, 1
        %s303 = scalar_lea.sflag [#allocation6], %s302
        %s304 = sand.u32 %s130, 1
        %s305 = smul.addr %s304, 8
        %s306 = scalar_lea.vmem [#allocation9], %s305
        %p307 = pneg %p169
        %p308 = pneg %p166
        %s309 = sand.u32 %s156, 1
        %s310 = scalar_lea.sflag [#allocation11], %s309
        %s311 = sand.u32 %s156, 1
        %s312 = smul.addr %s311, 8
        %s313 = scalar_lea.vmem [#allocation10], %s312
        %s314 = smul.u32 2, %s33
        %s315 = ssub.s32 3, %s314
        %p316 = scmp.lt.s32.totalorder %s315, 2
        %s317 = scalar_select %p316, %s315, 2
        %s318 = smul.u32 8, %s317
        %s319 = smul.u32 2, %s33
        %s320 = ssub.s32 3, %s319
        %p321 = scmp.lt.s32.totalorder %s320, 2
        %s322 = scalar_select %p321, %s320, 2
        %s323 = smul.u32 8, %s322
        %p324 = scmp.lt.s32.totalorder %s32, 1
        %s325 = scalar_select %p324, %s32, 1
        %s326 = smul.addr %s325, 8
        %s327 = scalar_lea.vmem %s2, %s326
        %p328 = scmp.eq.s32.totalorder %s33, 0
        // Predicated region
        $region41: #{tpu_custom_call.1} parent=31 // pred_check
          %p329 = pneg %p328
        $region42: #{tpu_custom_call.1} parent=31 // pred_check_branch
          %331 = sbr.rel (%p329) target = $region44
        $region43: #{tpu_custom_call.1} parent=31 // pred_region
          %vm332 = vcmask 7168
          %333 = vst.msk [vmem:[#allocation2] sm:$0xff] %vm332, 0.0
          %334 = vst.msk [vmem:[#allocation3] sm:$0xff] %vm332, 0
        $region44: #{tpu_custom_call.1} parent=31 // pred_fallthru
          _
        %v335 = vld [vmem:[%s264] sm:$0xff]
        %v336 = vld [vmem:[%s264 + $0x8] sm:$0xff]
        %v337 = vld [vmem:[%s274] sm:$0xff]
        %v338 = vld [vmem:[%s274 + $0x8] sm:$0xff]
        %vm339 = vcmp.ne.f32.partialorder %v337, %v337
        %vm340 = vcmp.ne.f32.partialorder %v338, %v338
        %vm341 = vmxor %vm339, 1
        %vm342 = vmxor %vm340, 1
        %v343 = vlaneseq
        %v344 = vand.u32 %v343, 127
        %v345 = vadd.s32 %v344, 128
        %s346 = smul.u32 %s33, 256
        %s347 = ssub.s32 300, %s346
        %v348 = vstv %s347
        %vm349 = vcmp.lt.s32.totalorder %v344, %v348
        %vm350 = vcmp.lt.s32.totalorder %v345, %v348
        %v351 = vsel %vm349, 1, 0
        %v352 = vsel %vm350, 1, 0
        %vm353 = vcmp.eq.s32.totalorder %v351, 1
        %vm354 = vcmp.eq.s32.totalorder %v352, 1
        %vm355 = vmand %vm341, %vm353
        %vm356 = vmand %vm342, %vm354
        %v357 = vsub.f32 %v335, %v337
        %v358 = vsub.f32 %v336, %v338
        %v359 = vmul.f32 %v357, %v357
        %v360 = vmul.f32 %v358, %v358
        %v361 = vsel %vm355, %v359, 0.0
        %v362 = vsel %vm356, %v360, 0.0
        %v363 = vld [vmem:[#allocation2] sm:$0xff]
        %v364 = vadd.f32 %v361, %v362
        %365 = vadd.xlane.f32.xlu0 %v364
        %v366 = vpop.xlane.xlu0 %365
        %v367 = vadd.f32 %v363, %v366
        %vm368 = vcmask 7168
        %369 = vst.msk [vmem:[#allocation2] sm:$0xff] %vm368, %v367
        %v370 = vsel %vm355, 1, 0
        %v371 = vsel %vm356, 1, 0
        %v372 = vcvt.s32.f32 %v370
        %v373 = vcvt.s32.f32 %v371
        %v374 = vadd.f32 %v372, %v373
        %375 = vadd.xlane.f32.xlu0 %v374
        %v376 = vpop.xlane.xlu0 %375
        %v377 = vld [vmem:[#allocation3] sm:$0xff]
        %v378 = vcvt.f32.s32.to.zero.pseudo %v376
        %v379 = vadd.s32 %v377, %v378
        %380 = vst.msk [vmem:[#allocation3] sm:$0xff] %vm368, %v379
        %p381 = scmp.eq.s32.totalorder %s33, 1
        // Predicated region
        $region45: #{tpu_custom_call.1} parent=31 // pred_check
          %p382 = pneg %p381
        $region46: #{tpu_custom_call.1} parent=31 // pred_check_branch
          %384 = sbr.rel (%p382) target = $region48
        $region47: #{tpu_custom_call.1} parent=31 // pred_region
          %v385 = vld [vmem:[%s327] sm:$0xff]
          %v386 = vadd.f32 %v385, 0.1
          %v387 = vmul.f32 %v386, %v386
          %v388 = vrcp.pop %v387
          %v389 = vmul.f32 %v387, %v388
          %v390 = vsub.f32 1.0, %v389
          %v391 = vmul.f32 %v388, %v390
          %v392 = vadd.f32 %v388, %v391
          %vm393 = vweird.f32 %v387
          %vm394 = vweird.f32 %v388
          %vm395 = vmor %vm393, %vm394
          %v396 = vsel %vm395, %v388, %v392
          %v397 = vand.u32 2147483647, %v387
          %vm398 = vcmp.eq.f32.partialorder %v397, 8.507059e+37
          %v399 = vand.u32 %v387, 2147483648
          %v400 = vor.u32 1.1754944e-38, %v399
          %v401 = vsel %vm398, %v400, %v396
          %v402 = vmul.f32 1.0, %v401
          %v403 = vld [vmem:[#allocation2] sm:$0xff]
          %v404 = vmul.f32 %v402, %v403
          %406 = vset.pattern.permute.xlu0 0
          %407 = vperm.xlu0 %406, %v404
          %v408 = vpop.permute.xlu0 %407
          %410 = vst [vmem:[%s306] sm:$0xff] %v408
          %v411 = vld [vmem:[#allocation3] sm:$0xff]
          %412 = vset.pattern.permute.xlu0 0
          %413 = vperm.xlu0 %412, %v411
          %v414 = vpop.permute.xlu0 %413
          %415 = vst [vmem:[%s313] sm:$0xff] %v414
        $region48: #{tpu_custom_call.1} parent=31 // pred_fallthru
          _
        %s416 = sand.u32 %s130, 1
        %s417 = scalar_lea.sflag [#allocation6], %s416
        %s418 = sand.u32 %s130, 1
        %s419 = smul.addr %s418, 8
        %s420 = scalar_lea.vmem [#allocation9], %s419
        %s421 = sand.u32 %s156, 1
        %s422 = scalar_lea.sflag [#allocation11], %s421
        %s423 = sand.u32 %s156, 1
        %s424 = smul.addr %s423, 8
        %s425 = scalar_lea.vmem [#allocation10], %s424
        // Predicated region
        $region49: #{tpu_custom_call.1} parent=31 // pred_check
          %p426 = pneg %p140
        $region50: #{tpu_custom_call.1} parent=31 // pred_check_branch
          %428 = sbr.rel (%p426) target = $region52
        $region51: #{tpu_custom_call.1} parent=31 // pred_region
          %430 = vsyncadd %s417, 0
          %s431 = smul.addr %s32, 8
          %s432 = scalar_lea.hbm %s3, %s431
          %s434 = sshll.u32 %s420, 4
          %s435 = int_to_ptr.vmem [resolvable:$true] %s434
          %s436 = sshll.u32 %s432, 4
          %s437 = int_to_ptr.hbm [resolvable:$true] %s436
          %439 = dma.vmem_to_hbm [thread:$0]  %s435, 128, %s437, %s417
        $region52: #{tpu_custom_call.1} parent=31 // pred_fallthru
          _
        // Predicated region
        $region53: #{tpu_custom_call.1} parent=31 // pred_check
          %p440 = pneg %p166
        $region54: #{tpu_custom_call.1} parent=31 // pred_check_branch
          %442 = sbr.rel (%p440) target = $region56
        $region55: #{tpu_custom_call.1} parent=31 // pred_region
          %444 = vsyncadd %s422, 0
          %s445 = smul.addr %s32, 8
          %s446 = scalar_lea.hbm %s4, %s445
          %s448 = sshll.u32 %s425, 4
          %s449 = int_to_ptr.vmem [resolvable:$true] %s448
          %s450 = sshll.u32 %s446, 4
          %s451 = int_to_ptr.hbm [resolvable:$true] %s450
          %453 = dma.vmem_to_hbm [thread:$0]  %s449, 128, %s451, %s422
        $region56: #{tpu_custom_call.1} parent=31 // pred_fallthru
          _
      $region32: #{tpu_custom_call.1} parent=5 // pred_fallthru
        _
      %p454 = scmp.le.s32.totalorder 2, %s23
      // Predicated region
      $region57: #{tpu_custom_call.1} parent=5 // pred_check
        %p455 = pneg %p454
      $region58: #{tpu_custom_call.1} parent=5 // pred_check_branch
        %457 = sbr.rel (%p455) target = $region60
      $region59: #{tpu_custom_call.1} parent=5 // pred_region
        %s458 = ssub.s32 %s23, 2
        // Predicated region
        $region61: #{tpu_custom_call.1} parent=59 // pred_check
          %p459 = pneg %p146
        $region62: #{tpu_custom_call.1} parent=59 // pred_check_branch
          %461 = sbr.rel (%p459) target = $region64
        $region63: #{tpu_custom_call.1} parent=59 // pred_region
          %s462 = sand.u32 %s131, 1
          %s463 = scalar_lea.sflag [#allocation6], %s462
          %s464 = sand.u32 %s131, 1
          %s465 = smul.addr %s464, 8
          %s466 = scalar_lea.vmem [#allocation9], %s465
          %468 = dma.done %s463, 128
        $region64: #{tpu_custom_call.1} parent=59 // pred_fallthru
          _
        // Predicated region
        $region65: #{tpu_custom_call.1} parent=59 // pred_check
          %p469 = pneg %p172
        $region66: #{tpu_custom_call.1} parent=59 // pred_check_branch
          %471 = sbr.rel (%p469) target = $region68
        $region67: #{tpu_custom_call.1} parent=59 // pred_region
          %s472 = sand.u32 %s157, 1
          %s473 = scalar_lea.sflag [#allocation11], %s472
          %s474 = sand.u32 %s157, 1
          %s475 = smul.addr %s474, 8
          %s476 = scalar_lea.vmem [#allocation10], %s475
          %478 = dma.done %s473, 128
        $region68: #{tpu_custom_call.1} parent=59 // pred_fallthru
          _
      $region60: #{tpu_custom_call.1} parent=5 // pred_fallthru
        _
    $region6: #{tpu_custom_call.1} parent=1 // loop_footer
      %s27 = sadd.s32 1, %s23
    $region7: #{tpu_custom_call.1} parent=1 // loop_footer_branch
      %22 = sbr.rel target = $region3
    $region8: #{tpu_custom_call.1} parent=1 // loop_exit
      _
    %479 = vsyncpa [#allocation5], 1
    %s480 = scalar_lea.sflag [#allocation5], 1
    %481 = vsyncpa %s480, 1
    %482 = vsyncpa [#allocation8], 1
    %s483 = scalar_lea.sflag [#allocation8], 1
    %484 = vsyncpa %s483, 1
    %485 = vsyncpa [#allocation6], 1
    %s486 = scalar_lea.sflag [#allocation6], 1
    %487 = vsyncpa %s486, 1
    %488 = vsyncpa [#allocation11], 1
    %s489 = scalar_lea.sflag [#allocation11], 1
    %490 = vsyncpa %s489, 1

</llo_original>
